<compile_context>
chip_gen: v7x
topology: tpu7x:2x2x1
jax: 0.10.0
libtpu: 0.0.40
codegen_flags: <defaults>
</compile_context>

<pallas_src>
import functools

import jax
import jax.numpy as jnp
from jax.experimental import pallas as pl
from jax.experimental.pallas import tpu as pltpu


# ---------------------------------------------------------------------------
# Kernels
# ---------------------------------------------------------------------------
def _softmax_pool(z_f32, scores, M, D):
    """Shared tail: softmax over the M view-scores and beta-weighted pooling of z."""
    s_max = jnp.max(scores, axis=-1, keepdims=True)
    e = jnp.exp(scores - s_max)
    beta = e / jnp.sum(e, axis=-1, keepdims=True)          # exact normalization
    out = beta[:, 0:1] * z_f32[:, 0:D]
    for m in range(1, M):                                   # static, tiny M
        out = out + beta[:, m:m + 1] * z_f32[:, m * D:(m + 1) * D]
    return out, beta


def _attn_kernel_blockdiag(z_ref, w1b_ref, b1_ref, w2b_ref, ob_ref, *, M, D, H):
    # z_ref   : (TN, M*D)   views concatenated along the lane axis
    # w1b_ref : (M*D, M*H)  block-diagonal first-layer weight  (kron(eye(M), w1))
    # b1_ref  : (1, M*H)    bias tiled per view
    # w2b_ref : (M*H, M)    block-diagonal second-layer weight (kron(eye(M), w2))
    # ob_ref  : (TN, D+M)   fused output slab [out | beta]
    z = z_ref[...]
    z_f32 = z.astype(jnp.float32)

    # Projection MLP for all M views in one wide MXU matmul.
    h = jnp.tanh(
        jnp.dot(z.astype(w1b_ref.dtype), w1b_ref[...],
                preferred_element_type=jnp.float32)
        + b1_ref[...].astype(jnp.float32))                  # (TN, M*H)

    # Per-view score via a second tiny block-diagonal matmul -> already lane-placed.
    scores = jnp.dot(h.astype(w2b_ref.dtype), w2b_ref[...],
                     preferred_element_type=jnp.float32)    # (TN, M)

    out, beta = _softmax_pool(z_f32, scores, M, D)
    ob_ref[...] = jnp.concatenate([out, beta], axis=-1).astype(ob_ref.dtype)


def _attn_kernel_loop(z_ref, w1_ref, b1_ref, w2_ref, ob_ref, *, M, D, H):
    # Fallback for larger M: loop views against the original (D, H) / (H, 1) weights
    # instead of materializing an (M*D, M*H) block-diagonal weight.
    z = z_ref[...]
    z_f32 = z.astype(jnp.float32)
    cols = []
    for m in range(M):                                      # static unrolled loop
        zm = z[:, m * D:(m + 1) * D].astype(w1_ref.dtype)
        hm = jnp.tanh(
            jnp.dot(zm, w1_ref[...], preferred_element_type=jnp.float32)
            + b1_ref[...].astype(jnp.float32))              # (TN, H)
        cols.append(jnp.dot(hm.astype(w2_ref.dtype), w2_ref[...],
                            preferred_element_type=jnp.float32))  # (TN, 1)
    scores = jnp.concatenate(cols, axis=-1)                 # (TN, M)
    out, beta = _softmax_pool(z_f32, scores, M, D)
    ob_ref[...] = jnp.concatenate([out, beta], axis=-1).astype(ob_ref.dtype)


# ---------------------------------------------------------------------------
# Tile selection
# ---------------------------------------------------------------------------
def _num_tensorcores():
    """Best-effort TensorCore count of device 0 (v7x megacore awareness)."""
    try:
        dev = jax.devices()[0]
        if getattr(dev, "platform", "") != "tpu":
            return 1
        for attr in ("num_cores", "core_count"):
            n = getattr(dev, attr, None)
            if isinstance(n, int) and n >= 1:
                return n
    except Exception:
        pass
    return 1


def _choose_tn(N, M, D, *, itemsize=4, max_tile=4096, vmem_budget=8 << 20, cores=1):
    """VMEM-budget-driven batch tile: biggest multiple of 8 such that the
    double-buffered z block plus the double-buffered fused output block fit in
    `vmem_budget`.  No divisibility requirement on N (wrapper pads)."""
    row_bytes = 2 * ((M * D) * itemsize + (D + M) * 4)      # double-buffered in + out
    cap = max(8, (vmem_budget // row_bytes) // 8 * 8)
    tn = min(max_tile, cap)
    n8 = -(-N // 8) * 8                                     # N rounded up to sublanes
    tn = min(tn, n8)                                        # never bigger than needed
    if cores >= 2 and tn >= n8 and N >= 16:
        # Megacore (v7x): split a would-be single step into two even blocks so both
        # TensorCores get work.  Single-TC chips keep the single largest tile.
        tn = max(8, ((n8 // 2 + 7) // 8) * 8)
    return max(8, tn)


# ---------------------------------------------------------------------------
# Wrapper
# ---------------------------------------------------------------------------
def attention_forward(z, w1, b1, w2, *, tn=None, compute_dtype=jnp.float32,
                      z_buffers=None):
    """z: (N, M, D) f32.  w1: (D, H), b1: (H,) or (1, H), w2: (H, 1).
    Returns (out (N, D), beta (N, M, 1)) matching the PyTorch module."""
    N, M, D = z.shape
    H = w1.shape[1]

    if tn is None:
        tn = _choose_tn(N, M, D, itemsize=jnp.dtype(z.dtype).itemsize,
                        cores=_num_tensorcores())
    tn = max(8, (tn // 8) * 8)

    # Lane-dense 2D layout; pad the batch to a multiple of the tile (pad rows are
    # sliced off below — softmax of all-equal scores on zero rows is well-defined).
    z2d = z.reshape(N, M * D)
    n_blocks = -(-N // tn)
    n_pad = n_blocks * tn
    if n_pad != N:
        z2d = jnp.pad(z2d, ((0, n_pad - N), (0, 0)))

    b1_row = jnp.reshape(b1, (1, H)).astype(jnp.float32)
    use_blockdiag = M <= 8                                  # kron weight grows as M^2*D*H

    z_spec_kwargs = {}
    if z_buffers is not None:                               # optional Buffered(3) sweep (v7x)
        z_spec_kwargs["pipeline_mode"] = pl.Buffered(z_buffers)
    z_spec = pl.BlockSpec((tn, M * D), lambda i: (i, 0), **z_spec_kwargs)

    if use_blockdiag:
        # NOTE: cheap at small M; hoist / cache these for larger M if reused.
        eye_m = jnp.eye(M, dtype=jnp.float32)
        w1_big = jnp.kron(eye_m, w1.astype(jnp.float32)).astype(compute_dtype)  # (M*D, M*H)
        b1_big = jnp.tile(b1_row, (1, M))                                       # (1, M*H)
        w2_big = jnp.kron(eye_m, w2.astype(jnp.float32)).astype(compute_dtype)  # (M*H, M)
        kernel = functools.partial(_attn_kernel_blockdiag, M=M, D=D, H=H)
        weight_args = (w1_big, b1_big, w2_big)
        weight_specs = [
            pl.BlockSpec((M * D, M * H), lambda i: (0, 0)),
            pl.BlockSpec((1, M * H), lambda i: (0, 0)),
            pl.BlockSpec((M * H, M), lambda i: (0, 0)),
        ]
    else:
        kernel = functools.partial(_attn_kernel_loop, M=M, D=D, H=H)
        weight_args = (w1.astype(compute_dtype), b1_row, w2.astype(compute_dtype))
        weight_specs = [
            pl.BlockSpec((D, H), lambda i: (0, 0)),
            pl.BlockSpec((1, H), lambda i: (0, 0)),
            pl.BlockSpec((H, 1), lambda i: (0, 0)),
        ]

    slab = pl.pallas_call(
        kernel,
        out_shape=jax.ShapeDtypeStruct((n_pad, D + M), jnp.float32),
        grid=(n_blocks,),
        in_specs=[z_spec] + weight_specs,
        out_specs=pl.BlockSpec((tn, D + M), lambda i: (i, 0)),
        compiler_params=pltpu.CompilerParams(
            dimension_semantics=("parallel",),
            vmem_limit_bytes=32 * 1024 * 1024,
        ),
    )(z2d, *weight_args)

    out = slab[:N, :D]
    beta = slab[:N, D:D + M]
    # Restore the (N, M, 1) beta shape of the PyTorch module.
    return out, beta[:, :, None]


def attention_reference(z, w1, b1, w2):
    """Pure-JAX reference matching the PyTorch module."""
    w = jnp.tanh(jnp.einsum("nmd,dh->nmh", z, w1) + jnp.reshape(b1, (1, 1, -1)))
    w = jnp.einsum("nmh,ho->nmo", w, w2)                    # (N, M, 1)
    beta = jax.nn.softmax(w, axis=1)                        # (N, M, 1)
    return (beta * z).sum(axis=1), beta


if __name__ == "__main__":
    # Small shapes consistent with the module: N samples, M=2 views, in_size=32, hidden=16.
    N, M, D, H = 16, 2, 32, 16

    key = jax.random.PRNGKey(0)
    kz, kw1, kb1, kw2 = jax.random.split(key, 4)

    z = jax.random.normal(kz, (N, M, D), dtype=jnp.float32)

    # Mimic nn.Linear uniform(-1/sqrt(fan_in), 1/sqrt(fan_in)) init, deterministically.
    lim1 = 1.0 / (D ** 0.5)
    lim2 = 1.0 / (H ** 0.5)
    w1 = jax.random.uniform(kw1, (D, H), minval=-lim1, maxval=lim1, dtype=jnp.float32)
    b1 = jax.random.uniform(kb1, (1, H), minval=-lim1, maxval=lim1, dtype=jnp.float32)
    w2 = jax.random.uniform(kw2, (H, 1), minval=-lim2, maxval=lim2, dtype=jnp.float32)

    out, beta = attention_forward(z, w1, b1, w2)
    out = jax.block_until_ready(out)
    beta = jax.block_until_ready(beta)

    out_ref, beta_ref = attention_reference(z, w1, b1, w2)
    assert out.shape == (N, D) and beta.shape == (N, M, 1)
    assert jnp.allclose(out, out_ref, atol=2e-3, rtol=2e-3), (
        float(jnp.max(jnp.abs(out - out_ref))))
    assert jnp.allclose(beta, beta_ref, atol=2e-3, rtol=2e-3), (
        float(jnp.max(jnp.abs(beta - beta_ref))))

    print("KERNEL_OK")
</pallas_src>

<mosaic_0001>
module attributes {stable_mosaic.version = 11 : i64} {
  func.func @_attn_kernel_blockdiag(%arg0: i32, %arg1: memref<16x64xf32, #tpu.memory_space<vmem>>, %arg2: memref<64x32xf32, #tpu.memory_space<vmem>>, %arg3: memref<1x32xf32, #tpu.memory_space<vmem>>, %arg4: memref<32x2xf32, #tpu.memory_space<vmem>>, %arg5: memref<16x34xf32, #tpu.memory_space<vmem>>) attributes {dimension_semantics = [#tpu.dimension_semantics<parallel>], iteration_bounds = array<i64: 1>, scalar_prefetch = 0 : i64, scratch_operands = 0 : i64, tpu.core_type = #tpu.core_type<tc>, window_params = [{transform_indices = @transform_0, window_bounds = array<i64: 16, 64>}, {pipeline_mode = #tpu.pipeline_mode<synchronous>, transform_indices = @transform_1, window_bounds = array<i64: 64, 32>}, {pipeline_mode = #tpu.pipeline_mode<synchronous>, transform_indices = @transform_2, window_bounds = array<i64: 1, 32>}, {pipeline_mode = #tpu.pipeline_mode<synchronous>, transform_indices = @transform_3, window_bounds = array<i64: 32, 2>}, {transform_indices = @transform_4, window_bounds = array<i64: 16, 34>}]} {
    %c0 = arith.constant 0 : index
    %c0_0 = arith.constant 0 : index
    %0 = vector.load %arg1[%c0, %c0_0] : memref<16x64xf32, #tpu.memory_space<vmem>>, vector<16x64xf32>
    %c0_1 = arith.constant 0 : index
    %c0_2 = arith.constant 0 : index
    %1 = vector.load %arg2[%c0_1, %c0_2] : memref<64x32xf32, #tpu.memory_space<vmem>>, vector<64x32xf32>
    %cst = arith.constant dense<0.000000e+00> : vector<16x32xf32>
    %2 = tpu.matmul %0, %1, %cst {dimension_numbers = #tpu.dot_dimension_numbers<[1], [0], [0], [1], [0, 0, 1, 1], [], []>} : vector<16x64xf32>, vector<64x32xf32>, vector<16x32xf32> -> vector<16x32xf32>
    %c0_3 = arith.constant 0 : index
    %c0_4 = arith.constant 0 : index
    %3 = vector.load %arg3[%c0_3, %c0_4] : memref<1x32xf32, #tpu.memory_space<vmem>>, vector<1x32xf32>
    %4 = vector.broadcast %3 : vector<1x32xf32> to vector<16x32xf32>
    %5 = arith.addf %2, %4 : vector<16x32xf32>
    %6 = math.tanh %5 : vector<16x32xf32>
    %c0_5 = arith.constant 0 : index
    %c0_6 = arith.constant 0 : index
    %7 = vector.load %arg4[%c0_5, %c0_6] : memref<32x2xf32, #tpu.memory_space<vmem>>, vector<32x2xf32>
    %cst_7 = arith.constant dense<0.000000e+00> : vector<16x2xf32>
    %8 = tpu.matmul %6, %7, %cst_7 {dimension_numbers = #tpu.dot_dimension_numbers<[1], [0], [0], [1], [0, 0, 1, 1], [], []>} : vector<16x32xf32>, vector<32x2xf32>, vector<16x2xf32> -> vector<16x2xf32>
    %cst_8 = arith.constant dense<0xFF800000> : vector<16xf32>
    %9 = vector.multi_reduction <maximumf>, %8, %cst_8 [1] : vector<16x2xf32> to vector<16xf32>
    %10 = vector.shape_cast %9 : vector<16xf32> to vector<16x1xf32>
    %11 = vector.broadcast %10 : vector<16x1xf32> to vector<16x2xf32>
    %12 = arith.subf %8, %11 : vector<16x2xf32>
    %13 = math.exp %12 : vector<16x2xf32>
    %cst_9 = arith.constant dense<0.000000e+00> : vector<16xf32>
    %14 = vector.multi_reduction <add>, %13, %cst_9 [1] : vector<16x2xf32> to vector<16xf32>
    %15 = vector.shape_cast %14 : vector<16xf32> to vector<16x1xf32>
    %16 = vector.broadcast %15 : vector<16x1xf32> to vector<16x2xf32>
    %17 = arith.divf %13, %16 : vector<16x2xf32>
    %18 = vector.extract_strided_slice %17 {offsets = [0, 0], sizes = [16, 1], strides = [1, 1]} : vector<16x2xf32> to vector<16x1xf32>
    %19 = vector.extract_strided_slice %0 {offsets = [0, 0], sizes = [16, 32], strides = [1, 1]} : vector<16x64xf32> to vector<16x32xf32>
    %20 = vector.broadcast %18 : vector<16x1xf32> to vector<16x32xf32>
    %21 = arith.mulf %20, %19 : vector<16x32xf32>
    %22 = vector.extract_strided_slice %17 {offsets = [0, 1], sizes = [16, 1], strides = [1, 1]} : vector<16x2xf32> to vector<16x1xf32>
    %23 = vector.extract_strided_slice %0 {offsets = [0, 32], sizes = [16, 32], strides = [1, 1]} : vector<16x64xf32> to vector<16x32xf32>
    %24 = vector.broadcast %22 : vector<16x1xf32> to vector<16x32xf32>
    %25 = arith.mulf %24, %23 : vector<16x32xf32>
    %26 = arith.addf %21, %25 : vector<16x32xf32>
    %27 = tpu.concatenate %26, %17 in 1 : vector<16x32xf32>, vector<16x2xf32> -> vector<16x34xf32>
    %c0_10 = arith.constant 0 : index
    %c0_11 = arith.constant 0 : index
    %28 = vector.load %arg5[%c0_10, %c0_11] : memref<16x34xf32, #tpu.memory_space<vmem>>, vector<16x34xf32>
    tpu.vector_store %arg5[%c0_10, %c0_11], %27 {strides = array<i32>} : memref<16x34xf32, #tpu.memory_space<vmem>>, vector<16x34xf32>,
    return
  }
  func.func @transform_0(%arg0: i32) -> (i32, i32) {
    %c0_i32 = arith.constant 0 : i32
    %c0_i32_0 = arith.constant 0 : i32
    return %arg0, %c0_i32 : i32, i32
  }
  func.func @transform_1(%arg0: i32) -> (i32, i32) {
    %c0_i32 = arith.constant 0 : i32
    %c0_i32_0 = arith.constant 0 : i32
    %c0_i32_1 = arith.constant 0 : i32
    return %c0_i32, %c0_i32_0 : i32, i32
  }
  func.func @transform_2(%arg0: i32) -> (i32, i32) {
    %c0_i32 = arith.constant 0 : i32
    %c0_i32_0 = arith.constant 0 : i32
    %c0_i32_1 = arith.constant 0 : i32
    return %c0_i32, %c0_i32_0 : i32, i32
  }
  func.func @transform_3(%arg0: i32) -> (i32, i32) {
    %c0_i32 = arith.constant 0 : i32
    %c0_i32_0 = arith.constant 0 : i32
    %c0_i32_1 = arith.constant 0 : i32
    return %c0_i32, %c0_i32_0 : i32, i32
  }
  func.func @transform_4(%arg0: i32) -> (i32, i32) {
    %c0_i32 = arith.constant 0 : i32
    %c0_i32_0 = arith.constant 0 : i32
    return %arg0, %c0_i32 : i32, i32
  }
}

</mosaic_0001>

<llo_original>
// kernel: tpu_custom_call.1
$region0: #{tpu_custom_call.1}
  #allocation0 [shape = 'u32[]', space=smem, size = 0x4, offset = 0x4, fixed_abs, tag = 'smem constant byte address 0x4 - core index']
  #allocation1 [shape = 'u32[144,128]{1,0:T(1,128)}', space=vmem, size = 0x12000, scoped, tag = 'internal scratch']
  %s0 = inlined_call_operand.vmem [shape: f32[16,64], index: 0, kind: input, shape index: {}]
  %s1 = inlined_call_operand.vmem [shape: f32[64,32], index: 1, kind: input, shape index: {}]
  %s2 = inlined_call_operand.vmem [shape: f32[1,32], index: 2, kind: input, shape index: {}]
  %s3 = inlined_call_operand.vmem [shape: f32[32,2], index: 3, kind: input, shape index: {}]
  %s4 = inlined_call_operand.hbm [shape: f32[16,34], index: 4, kind: output, shape index: {}]
  %s5 = sld [smem:[#allocation0]]
  $region26: #{tpu_custom_call.1} parent=0
    _
  %s7 = ssub.s32 1, %s5
  %s8 = scalar_select 0, %s7, %s5
  $region1: #{tpu_custom_call.1} parent=0
    #allocation2 [shape = 'u8[8192]{0}', space=vmem, size = 0x2000, scoped, tag = 'output window, operand 0, single buffered']
    #allocation3 [shape = 's32[1]{0}', space=sflag, size = 0x4, scoped, tag = 'scoped memory for tpu_custom_call.1']
    %9 = vsyncpa [#allocation3], 0
    // Predicated region
    $region2: #{tpu_custom_call.1} parent=1 // pred_check
      _
    $region3: #{tpu_custom_call.1} parent=1 // pred_check_branch
      %11 = sbr.rel (0) target = $region5
    $region4: #{tpu_custom_call.1} parent=1 // pred_region
      _
    $region5: #{tpu_custom_call.1} parent=1 // pred_fallthru
      _
    // Predicated region
    $region6: #{tpu_custom_call.1} parent=1 // pred_check
      _
    $region7: #{tpu_custom_call.1} parent=1 // pred_check_branch
      %13 = sbr.rel (0) target = $region9
    $region8: #{tpu_custom_call.1} parent=1 // pred_region
      _
    $region9: #{tpu_custom_call.1} parent=1 // pred_fallthru
      _
    // Predicated region
    $region10: #{tpu_custom_call.1} parent=1 // pred_check
      _
    $region11: #{tpu_custom_call.1} parent=1 // pred_check_branch
      %15 = sbr.rel (0) target = $region13
    $region12: #{tpu_custom_call.1} parent=1 // pred_region
      _
    $region13: #{tpu_custom_call.1} parent=1 // pred_fallthru
      _
    // Predicated region
    $region14: #{tpu_custom_call.1} parent=1 // pred_check
      _
    $region15: #{tpu_custom_call.1} parent=1 // pred_check_branch
      %17 = sbr.rel (0) target = $region17
    $region16: #{tpu_custom_call.1} parent=1 // pred_region
      _
    $region17: #{tpu_custom_call.1} parent=1 // pred_fallthru
      _
    %v18 = vld [vmem:[%s0] sm:$0xff]
    %v19 = vld [vmem:[%s0 + $0x8] sm:$0xff]
    %v20 = vld [vmem:[%s1] sm:$0xff]
    %v21 = vld [vmem:[%s1 + $0x8] sm:$0xff]
    %v22 = vld [vmem:[%s1 + $0x10] sm:$0xff]
    %v23 = vld [vmem:[%s1 + $0x18] sm:$0xff]
    %v24 = vld [vmem:[%s1 + $0x20] sm:$0xff]
    %v25 = vld [vmem:[%s1 + $0x28] sm:$0xff]
    %v26 = vld [vmem:[%s1 + $0x30] sm:$0xff]
    %v27 = vld [vmem:[%s1 + $0x38] sm:$0xff]
    %v28 = vld [vmem:[%s2] sm:$0x1]
    %v30 = vlaneseq
    %v31 = vshrl.u32 %v30, 7
    %v32 = vsub.s32 0, %v31
    %v33 = vrot.slane %v28, %v32
    %vm35 = vcmask 523264
    %v37 = vsel %vm35, %v18, 0
    %v40 = vsel %vm35, %v19, 0
    %42 = vmatprep.subr.mxu0 0.0
    %43 = vmatpush1.msra.mxu0 %v20
    %44 = vmatprep.subr.mxu0 0.0
    %45 = vmatpush1.msra.mxu0 %v21
    %46 = vmatprep.subr.mxu0 0.0
    %47 = vmatpush1.msra.mxu0 %v22
    %48 = vmatprep.subr.mxu0 0.0
    %49 = vmatpush1.msra.mxu0 %v23
    %50 = vmatprep.subr.mxu0 0.0
    %51 = vmatpush1.msra.mxu0 %v24
    %52 = vmatprep.subr.mxu0 0.0
    %53 = vmatpush1.msra.mxu0 %v25
    %54 = vmatprep.subr.mxu0 0.0
    %55 = vmatpush1.msra.mxu0 %v26
    %56 = vmatprep.subr.mxu0 0.0
    %57 = vmatpush1.msra.mxu0 %v27
    %58 = vmatprep.subr.mxu0 0.0
    %59 = vmatpush1.msra.mxu0 0.0
    %60 = vmatprep.subr.mxu0 0.0
    %61 = vmatpush1.msra.mxu0 0.0
    %62 = vmatprep.subr.mxu0 0.0
    %63 = vmatpush1.msra.mxu0 0.0
    %64 = vmatprep.subr.mxu0 0.0
    %65 = vmatpush1.msra.mxu0 0.0
    %66 = vmatprep.subr.mxu0 0.0
    %67 = vmatpush1.msra.mxu0 0.0
    %68 = vmatprep.subr.mxu0 0.0
    %69 = vmatpush1.msra.mxu0 0.0
    %70 = vmatprep.subr.mxu0 0.0
    %71 = vmatpush1.msra.mxu0 0.0
    %72 = vmatprep.subr.mxu0 0.0
    %73 = vmatpush1.msra.mxu0 0.0
    %74 = vmatprep.subr.mxu0 0.0
    %75 = vmatpush1.msra.mxu0 0.0
    %76 = vmatprep.subr.mxu0 0.0
    %77 = vmatpush1.msra.mxu0 0.0
    %78 = vmatprep.subr.mxu0 0.0
    %79 = vmatpush1.msra.mxu0 0.0
    %80 = vmatprep.subr.mxu0 0.0
    %81 = vmatpush1.msra.mxu0 0.0
    %82 = vmatprep.subr.mxu0 0.0
    %83 = vmatpush1.msra.mxu0 0.0
    %84 = vmatprep.subr.mxu0 0.0
    %85 = vmatpush1.msra.mxu0 0.0
    %86 = vmatprep.subr.mxu0 0.0
    %87 = vmatpush1.msra.mxu0 0.0
    %88 = vmatprep.subr.mxu0 0.0
    %89 = vmatpush1.msra.mxu0 0.0
    %90 = vmatprep.subr.mxu0 0.0
    %91 = vmatpush1.msra.mxu0 0.0
    %92 = vmatprep.subr.mxu0 0.0
    %93 = vmatpush1.msra.mxu0 0.0
    %94 = vmatprep.subr.mxu0 0.0
    %95 = vmatpush1.msra.mxu0 0.0
    %96 = vmatprep.subr.mxu0 0.0
    %97 = vmatpush1.msra.mxu0 0.0
    %98 = vmatprep.subr.mxu0 0.0
    %99 = vmatpush1.msra.mxu0 0.0
    %100 = vmatprep.subr.mxu0 0.0
    %101 = vmatpush1.msra.mxu0 0.0
    %102 = vmatprep.subr.mxu0 0.0
    %103 = vmatpush1.msra.mxu0 0.0
    %104 = vmatprep.subr.mxu0 0.0
    %105 = vmatpush1.msra.mxu0 0.0
    %106 = vmatprep.mubr.f32.mxu0 0.0
    %107 = vmatmul.mubr.f32.gmra.mrb[0].mxu0 %v37
    %v108 = vpop.f32.mrb[0].mxu0
    %v109 = vadd.f32 %v33, %v108
    %v110 = vpop.f32.mrb[0].mxu0
    %111 = vmatprep.mubr.f32.mxu0 0.0
    %112 = vmatmul.mubr.f32.gmra.mrb[0].mxu0 %v40
    %v113 = vpop.f32.mrb[0].mxu0
    %v114 = vadd.f32 %v33, %v113
    %v115 = vpop.f32.mrb[0].mxu0
    %116 = vdwg.mxu0
    %v117 = vtanh.pop %v109
    %v118 = vtanh.pop %v114
    %v119 = vld [vmem:[%s3] sm:$0xff]
    %v120 = vld [vmem:[%s3 + $0x8] sm:$0xff]
    %v121 = vld [vmem:[%s3 + $0x10] sm:$0xff]
    %v122 = vld [vmem:[%s3 + $0x18] sm:$0xff]
    %vm123 = vcmask 261120
    %v125 = vsel %vm123, %v117, 0
    %v128 = vsel %vm123, %v118, 0
    %130 = vmatprep.subr.mxu0 0.0
    %131 = vmatpush1.msra.mxu0 %v119
    %132 = vmatprep.subr.mxu0 0.0
    %133 = vmatpush1.msra.mxu0 %v120
    %134 = vmatprep.subr.mxu0 0.0
    %135 = vmatpush1.msra.mxu0 %v121
    %136 = vmatprep.subr.mxu0 0.0
    %137 = vmatpush1.msra.mxu0 %v122
    %138 = vmatprep.subr.mxu0 0.0
    %139 = vmatpush1.msra.mxu0 0.0
    %140 = vmatprep.subr.mxu0 0.0
    %141 = vmatpush1.msra.mxu0 0.0
    %142 = vmatprep.subr.mxu0 0.0
    %143 = vmatpush1.msra.mxu0 0.0
    %144 = vmatprep.subr.mxu0 0.0
    %145 = vmatpush1.msra.mxu0 0.0
    %146 = vmatprep.subr.mxu0 0.0
    %147 = vmatpush1.msra.mxu0 0.0
    %148 = vmatprep.subr.mxu0 0.0
    %149 = vmatpush1.msra.mxu0 0.0
    %150 = vmatprep.subr.mxu0 0.0
    %151 = vmatpush1.msra.mxu0 0.0
    %152 = vmatprep.subr.mxu0 0.0
    %153 = vmatpush1.msra.mxu0 0.0
    %154 = vmatprep.subr.mxu0 0.0
    %155 = vmatpush1.msra.mxu0 0.0
    %156 = vmatprep.subr.mxu0 0.0
    %157 = vmatpush1.msra.mxu0 0.0
    %158 = vmatprep.subr.mxu0 0.0
    %159 = vmatpush1.msra.mxu0 0.0
    %160 = vmatprep.subr.mxu0 0.0
    %161 = vmatpush1.msra.mxu0 0.0
    %162 = vmatprep.subr.mxu0 0.0
    %163 = vmatpush1.msra.mxu0 0.0
    %164 = vmatprep.subr.mxu0 0.0
    %165 = vmatpush1.msra.mxu0 0.0
    %166 = vmatprep.subr.mxu0 0.0
    %167 = vmatpush1.msra.mxu0 0.0
    %168 = vmatprep.subr.mxu0 0.0
    %169 = vmatpush1.msra.mxu0 0.0
    %170 = vmatprep.subr.mxu0 0.0
    %171 = vmatpush1.msra.mxu0 0.0
    %172 = vmatprep.subr.mxu0 0.0
    %173 = vmatpush1.msra.mxu0 0.0
    %174 = vmatprep.subr.mxu0 0.0
    %175 = vmatpush1.msra.mxu0 0.0
    %176 = vmatprep.subr.mxu0 0.0
    %177 = vmatpush1.msra.mxu0 0.0
    %178 = vmatprep.subr.mxu0 0.0
    %179 = vmatpush1.msra.mxu0 0.0
    %180 = vmatprep.subr.mxu0 0.0
    %181 = vmatpush1.msra.mxu0 0.0
    %182 = vmatprep.subr.mxu0 0.0
    %183 = vmatpush1.msra.mxu0 0.0
    %184 = vmatprep.subr.mxu0 0.0
    %185 = vmatpush1.msra.mxu0 0.0
    %186 = vmatprep.subr.mxu0 0.0
    %187 = vmatpush1.msra.mxu0 0.0
    %188 = vmatprep.subr.mxu0 0.0
    %189 = vmatpush1.msra.mxu0 0.0
    %190 = vmatprep.subr.mxu0 0.0
    %191 = vmatpush1.msra.mxu0 0.0
    %192 = vmatprep.subr.mxu0 0.0
    %193 = vmatpush1.msra.mxu0 0.0
    %194 = vmatprep.mubr.f32.mxu0 0.0
    %195 = vmatmul.mubr.f32.gmra.mrb[0].mxu0 %v125
    %v196 = vpop.f32.mrb[0].mxu0
    %v197 = vadd.f32 0.0, %v196
    %v198 = vpop.f32.mrb[0].mxu0
    %199 = vmatprep.mubr.f32.mxu0 0.0
    %200 = vmatmul.mubr.f32.gmra.mrb[0].mxu0 %v128
    %v201 = vpop.f32.mrb[0].mxu0
    %v202 = vadd.f32 0.0, %v201
    %v203 = vpop.f32.mrb[0].mxu0
    %204 = vdwg.mxu0
    %vm205 = vcmask 15360
    %v206 = vsel %vm205, %v197, -inf
    %207 = vmax.xlane.f32.xlu0 %v206
    %v208 = vpop.xlane.xlu0 %207
    %v209 = vsel %vm205, %v202, -inf
    %210 = vmax.xlane.f32.xlu0 %v209
    %v211 = vpop.xlane.xlu0 %210
    %v212 = vsub.f32 %v197, %v208
    %v213 = vsub.f32 %v202, %v211
    %v214 = vmul.f32 %v212, 1.442695
    %v215 = vpow.pop %v214
    %v216 = vmul.f32 %v213, 1.442695
    %v217 = vpow.pop %v216
    %v218 = vsel %vm205, %v215, 0.0
    %219 = vadd.xlane.f32.xlu0 %v218
    %v220 = vpop.xlane.xlu0 %219
    %v221 = vsel %vm205, %v217, 0.0
    %222 = vadd.xlane.f32.xlu0 %v221
    %v223 = vpop.xlane.xlu0 %222
    %v224 = vrcp.pop %v220
    %v225 = vmul.f32 %v215, %v224
    %v226 = vrcp.pop %v223
    %v227 = vmul.f32 %v217, %v226
    %229 = vset.pattern.permute.xlu0 0
    %230 = vperm.xlu0 %229, %v225
    %v231 = vpop.permute.xlu0 %230
    %234 = vset.pattern.permute.xlu0 0
    %235 = vperm.xlu0 %234, %v227
    %v236 = vpop.permute.xlu0 %235
    %v238 = vmul.f32 %v231, %v18
    %v239 = vmul.f32 %v236, %v19
    %240 = vset.pattern.permute.xlu0 1
    %241 = vperm.xlu0 %240, %v225
    %v242 = vpop.permute.xlu0 %241
    %244 = vset.pattern.permute.xlu0 1
    %245 = vperm.xlu0 %244, %v227
    %v246 = vpop.permute.xlu0 %245
    %v248 = vmul.f32 %v242, %v18
    %v249 = vmul.f32 %v246, %v19
    %252 = vrot.lane.b32.xlu0 %v248, 96
    %v253 = vpop.permute.xlu0 %252
    %254 = vrot.lane.b32.xlu0 %v249, 96
    %v255 = vpop.permute.xlu0 %254
    %v258 = vadd.f32 %v238, %v253
    %v259 = vadd.f32 %v239, %v255
    %260 = vrot.lane.b32.xlu0 %v225, 32
    %v261 = vpop.permute.xlu0 %260
    %262 = vrot.lane.b32.xlu0 %v227, 32
    %v263 = vpop.permute.xlu0 %262
    %v266 = vsel %vm123, %v258, %v261
    %v267 = vsel %vm123, %v259, %v263
    %vm268 = vcmask 277504
    %269 = vst.msk [vmem:[#allocation2] sm:$0xff] %vm268, %v266
    %270 = vst.msk [vmem:[#allocation2 + $0x8] sm:$0xff] %vm268, %v267
    // Predicated region
    $region18: #{tpu_custom_call.1} parent=1 // pred_check
      _
    $region19: #{tpu_custom_call.1} parent=1 // pred_check_branch
      %272 = sbr.rel (0) target = $region21
    $region20: #{tpu_custom_call.1} parent=1 // pred_region
      %s274 = ssub.s32 256, 256
      %275 = vsyncadd [#allocation3], %s274
      %s276 = sshll.u32 [#allocation2], 4
      %s277 = int_to_ptr.vmem [resolvable:$true] %s276
      %282 = dma.vmem_to_hbm [thread:$0]  %s277, 256, %s4, [#allocation3], 128, 128, 8
    $region21: #{tpu_custom_call.1} parent=1 // pred_fallthru
      _
    // Predicated region
    $region22: #{tpu_custom_call.1} parent=1 // pred_check
      _
    $region23: #{tpu_custom_call.1} parent=1 // pred_check_branch
      %284 = sbr.rel (0) target = $region25
    $region24: #{tpu_custom_call.1} parent=1 // pred_region
      %285 = dma.done [#allocation3], 256
    $region25: #{tpu_custom_call.1} parent=1 // pred_fallthru
      _
    %286 = vsyncpa [#allocation3], 1

</llo_original>
